<compile_context>
chip_gen: v6e
topology: v6e:2x2x1
jax: 0.10.0
libtpu: 0.0.40
codegen_flags: <defaults>
</compile_context>

<pallas_src>
import jax
import jax.numpy as jnp
from jax import lax
from jax.experimental import pallas as pl
from jax.experimental.pallas import tpu as pltpu


LANE = 128
SUBLANE = 8
MAX_TILE_BYTES = 4 * 1024 * 1024        # target x-tile size (double-buffered -> 8 MiB)
VMEM_LIMIT_BYTES = 32 * 1024 * 1024     # explicit scoped limit, safe on v5e/v6e/v7x


# ----------------------------- helpers ------------------------------------- #

def _round_up(a, b):
    return -(-a // b) * b


def _pack_params(batch, d_input, itemsize):
    """Lane-packing + tiling parameters (all Python ints)."""
    if d_input <= LANE and LANE % d_input == 0:
        pack = LANE // d_input          # original rows per 128-lane packed row
    else:
        pack = 1                        # D doesn't divide 128: no packing
    pack_pad = _round_up(pack, SUBLANE)  # sublane-aligned pack dim
    d_packed = pack * d_input
    bp = -(-batch // pack)              # packed rows needed
    max_rows = max(LANE,
                   (MAX_TILE_BYTES // max(1, d_packed * itemsize)) // LANE * LANE)
    tile_p = min(max_rows, _round_up(bp, LANE))   # packed rows per tile (mult of 128)
    return pack, pack_pad, d_packed, bp, tile_p


def _pack_x(x, batch_padded, pack, d_packed):
    b = x.shape[0]
    x_pad = jnp.pad(x, ((0, batch_padded - b), (0, 0)))
    return x_pad.reshape(batch_padded // pack, d_packed)


def _pack_w(w, pack, pack_pad, dtype):
    """Block-diagonal weight: row j holds w in lanes [j*D:(j+1)*D]."""
    w_flat = jnp.asarray(w, dtype).reshape(-1)
    w_pack = jnp.kron(jnp.eye(pack, dtype=dtype), w_flat[None, :])  # (pack, pack*D)
    if pack_pad > pack:
        w_pack = jnp.pad(w_pack, ((0, pack_pad - pack), (0, 0)))
    return w_pack


def _pack_y(y, batch_padded, pack, pack_pad):
    """(B,1)/(B,) targets -> lane-dense (pack_pad, B_packed) layout."""
    y_flat = y.reshape(-1)
    y_pad = jnp.pad(y_flat, (0, batch_padded - y_flat.shape[0]))
    y_t = y_pad.reshape(batch_padded // pack, pack).T            # (pack, bp_padded)
    if pack_pad > pack:
        y_t = jnp.pad(y_t, ((0, pack_pad - pack), (0, 0)))
    return y_t


# ----------------------------- forward ------------------------------------- #

def regression_forward(x, w, b):
    """forward(x) = x @ W + b  ->  (batch, 1) float32."""
    batch, d_input = x.shape
    pack, pack_pad, d_packed, bp, tile_p = _pack_params(
        batch, d_input, x.dtype.itemsize)
    tiles = -(-bp // tile_p)
    bp_padded = tiles * tile_p
    batch_padded = bp_padded * pack

    x_p = _pack_x(x, batch_padded, pack, d_packed)
    w_p = _pack_w(w, pack, pack_pad, x.dtype)
    b_s = jnp.asarray(b, jnp.float32).reshape(1)

    def fwd_kernel(x_ref, w_ref, b_ref, o_ref):
        # (pack_pad, Dp) @ (tile_p, Dp)^T -> (pack_pad, tile_p): lane-dense output.
        pred = lax.dot_general(
            w_ref[...], x_ref[...], (((1,), (1,)), ((), ())),
            preferred_element_type=jnp.float32)
        o_ref[...] = pred + b_ref[0]

    out = pl.pallas_call(
        fwd_kernel,
        out_shape=jax.ShapeDtypeStruct((pack_pad, bp_padded), jnp.float32),
        grid=(tiles,),
        in_specs=[
            pl.BlockSpec((tile_p, d_packed), lambda i: (i, 0)),      # x tile
            pl.BlockSpec((pack_pad, d_packed), lambda i: (0, 0)),    # block-diag W
            pl.BlockSpec(memory_space=pltpu.SMEM),                   # bias scalar
        ],
        out_specs=pl.BlockSpec((pack_pad, tile_p), lambda i: (0, i)),
        compiler_params=pltpu.CompilerParams(
            dimension_semantics=("parallel",),
            vmem_limit_bytes=VMEM_LIMIT_BYTES),
    )(x_p, w_p, b_s)

    # Layout plumbing back to (batch, 1): drop sublane padding, restore row order.
    pred = out[:pack, :].T.reshape(-1)[:batch]
    return pred.reshape(batch, 1)


# ----------------------- fused forward + MSE loss -------------------------- #

def regression_training_step(x, y, w, b):
    """Fused forward + MSE: one pallas_call, one streaming pass over x."""
    batch, d_input = x.shape
    pack, pack_pad, d_packed, bp, tile_p = _pack_params(
        batch, d_input, x.dtype.itemsize)
    tiles_total = -(-bp // tile_p)
    ncores = 2 if tiles_total >= 2 else 1    # v7x: 2 TCs; harmless on v5e/v6e
    tpc = -(-tiles_total // ncores)          # tiles per core
    bp_padded = ncores * tpc * tile_p
    batch_padded = bp_padded * pack

    x_p = _pack_x(x, batch_padded, pack, d_packed)
    w_p = _pack_w(w, pack, pack_pad, x.dtype)
    y_p = _pack_y(y, batch_padded, pack, pack_pad)
    b_s = jnp.asarray(b, jnp.float32).reshape(1)

    def fused_kernel(x_ref, w_ref, b_ref, y_ref, part_ref, acc_ref):
        c = pl.program_id(0)     # core / partial-sum index (parallel)
        i = pl.program_id(1)     # batch-tile index         (arbitrary)

        @pl.when(i == 0)
        def _init():
            acc_ref[...] = jnp.zeros_like(acc_ref)

        pred = lax.dot_general(                        # (pack_pad, tile_p), f32
            w_ref[...], x_ref[...], (((1,), (1,)), ((), ())),
            preferred_element_type=jnp.float32) + b_ref[0]
        d = pred - y_ref[...].astype(jnp.float32)

        # Mask lane-pack padding rows (j >= pack) and batch-tail padding out of
        # the sum (padded rows predict `b`, not 0, so they must be excluded).
        r_idx = lax.broadcasted_iota(jnp.int32, d.shape, 1)
        j_idx = lax.broadcasted_iota(jnp.int32, d.shape, 0)
        base = (c * tpc + i) * tile_p
        orig = (base + r_idx) * pack + j_idx
        valid = (j_idx < pack) & (orig < batch)
        # Pure VALU adds per step; cross-lane reduce deferred to finalize.
        acc_ref[...] += jnp.where(valid, d * d, 0.0)

        @pl.when(i == tpc - 1)
        def _finalize():
            part_ref[...] = (jnp.zeros((SUBLANE, LANE), jnp.float32)
                             + jnp.sum(acc_ref[...]))

    partials = pl.pallas_call(
        fused_kernel,
        out_shape=jax.ShapeDtypeStruct((ncores * SUBLANE, LANE), jnp.float32),
        grid=(ncores, tpc),
        in_specs=[
            pl.BlockSpec((tile_p, d_packed), lambda c, i: (c * tpc + i, 0)),   # x
            pl.BlockSpec((pack_pad, d_packed), lambda c, i: (0, 0)),           # W
            pl.BlockSpec(memory_space=pltpu.SMEM),                             # bias
            pl.BlockSpec((pack_pad, tile_p), lambda c, i: (0, c * tpc + i)),   # y
        ],
        out_specs=pl.BlockSpec((SUBLANE, LANE), lambda c, i: (c, 0)),          # partials
        scratch_shapes=[pltpu.VMEM((pack_pad, tile_p), jnp.float32)],          # d^2 acc
        compiler_params=pltpu.CompilerParams(
            dimension_semantics=("parallel", "arbitrary"),
            vmem_limit_bytes=VMEM_LIMIT_BYTES),
    )(x_p, w_p, b_s, y_p)

    per_core = partials.reshape(ncores, SUBLANE, LANE)[:, 0, 0]
    return jnp.sum(per_core) * (1.0 / batch)


# --------------------------- standalone MSE loss --------------------------- #

def regression_loss(pred, y):
    """Standalone MSE (cold path); tiled with a VMEM accumulator."""
    n = pred.size
    tile_n = min(32768, _round_up(n, LANE))
    tiles = -(-n // tile_n)
    n_pad = tiles * tile_n
    inv_n = 1.0 / n

    # Both padded with zeros -> padded diffs are exactly 0 (no mask needed).
    p_row = jnp.pad(pred.reshape(-1), (0, n_pad - n)).reshape(1, n_pad)
    y_row = jnp.pad(y.reshape(-1), (0, n_pad - n)).reshape(1, n_pad)

    def mse_kernel(p_ref, y_ref, loss_ref, acc_ref):
        i = pl.program_id(0)

        @pl.when(i == 0)
        def _init():
            acc_ref[...] = jnp.zeros_like(acc_ref)

        d = p_ref[...].astype(jnp.float32) - y_ref[...].astype(jnp.float32)
        acc_ref[...] += d * d

        @pl.when(i == pl.num_programs(0) - 1)
        def _fin():
            loss_ref[0, 0] = jnp.sum(acc_ref[...]) * inv_n

    out = pl.pallas_call(
        mse_kernel,
        out_shape=jax.ShapeDtypeStruct((1, 1), jnp.float32),
        grid=(tiles,),
        in_specs=[
            pl.BlockSpec((1, tile_n), lambda i: (0, i)),
            pl.BlockSpec((1, tile_n), lambda i: (0, i)),
        ],
        out_specs=pl.BlockSpec(memory_space=pltpu.SMEM),
        scratch_shapes=[pltpu.VMEM((1, tile_n), jnp.float32)],
        compiler_params=pltpu.CompilerParams(
            dimension_semantics=("arbitrary",),
            vmem_limit_bytes=VMEM_LIMIT_BYTES),
    )(p_row, y_row)
    return out[0, 0]


# ------------------------- module-level entry points ----------------------- #

def training_step(x, y, w, b):
    # Mirrors Regression.training_step: loss(forward(*batch[:-1]), batch[-1]).
    # (The PyTorch base class computes the loss twice and discards one; we
    #  compute it once.)
    return regression_training_step(x, y, w, b)


def validation_step(x, y, w, b):
    return regression_training_step(x, y, w, b)


# ------------------------------- main -------------------------------------- #

if __name__ == "__main__":
    batch, d_input = 8, 32

    key = jax.random.PRNGKey(0)
    kx, kw, kb, kn = jax.random.split(key, 4)

    x = jax.random.normal(kx, (batch, d_input), dtype=jnp.float32)
    w = jax.random.normal(kw, (d_input, 1), dtype=jnp.float32) * 0.1
    b = jax.random.normal(kb, (1,), dtype=jnp.float32) * 0.1
    y = x @ w + b + 0.01 * jax.random.normal(kn, (batch, 1), dtype=jnp.float32)

    pred = regression_forward(x, w, b)
    loss_fused = training_step(x, y, w, b)
    loss_standalone = regression_loss(pred, y)
    jax.block_until_ready((pred, loss_fused, loss_standalone))

    # correctness vs plain-JAX reference
    pred_ref = x @ w + b
    loss_ref = jnp.mean((pred_ref - y) ** 2)
    assert pred.shape == (batch, 1), "forward shape mismatch"
    assert jnp.allclose(pred, pred_ref, atol=1e-5), "forward mismatch"
    assert jnp.allclose(loss_fused, loss_ref, atol=1e-5), "fused loss mismatch"
    assert jnp.allclose(loss_standalone, loss_ref, atol=1e-5), "loss mismatch"

    print("KERNEL_OK")
</pallas_src>

<mosaic_0001>
module attributes {stable_mosaic.version = 11 : i64} {
  func.func @fwd_kernel(%arg0: i32, %arg1: memref<128x128xf32, #tpu.memory_space<vmem>>, %arg2: memref<8x128xf32, #tpu.memory_space<vmem>>, %arg3: memref<1xf32, #tpu.memory_space<smem>>, %arg4: memref<8x128xf32, #tpu.memory_space<vmem>>) attributes {dimension_semantics = [#tpu.dimension_semantics<parallel>], iteration_bounds = array<i64: 1>, scalar_prefetch = 0 : i64, scratch_operands = 0 : i64, tpu.core_type = #tpu.core_type<tc>, window_params = [{transform_indices = @transform_0, window_bounds = array<i64: 128, 128>}, {pipeline_mode = #tpu.pipeline_mode<synchronous>, transform_indices = @transform_1, window_bounds = array<i64: 8, 128>}, {transform_indices = @transform_2, window_bounds = array<i64: 1>}, {transform_indices = @transform_3, window_bounds = array<i64: 8, 128>}]} {
    %c0 = arith.constant 0 : index
    %c0_0 = arith.constant 0 : index
    %0 = vector.load %arg2[%c0, %c0_0] : memref<8x128xf32, #tpu.memory_space<vmem>>, vector<8x128xf32>
    %c0_1 = arith.constant 0 : index
    %c0_2 = arith.constant 0 : index
    %1 = vector.load %arg1[%c0_1, %c0_2] : memref<128x128xf32, #tpu.memory_space<vmem>>, vector<128x128xf32>
    %cst = arith.constant dense<0.000000e+00> : vector<8x128xf32>
    %2 = tpu.matmul %0, %1, %cst {dimension_numbers = #tpu.dot_dimension_numbers<[1], [1], [0], [0], [0, 0, 1, 0], [], []>} : vector<8x128xf32>, vector<128x128xf32>, vector<8x128xf32> -> vector<8x128xf32>
    %c0_3 = arith.constant 0 : index
    %3 = memref.load %arg3[%c0_3] : memref<1xf32, #tpu.memory_space<smem>>
    %4 = vector.broadcast %3 : f32 to vector<8x128xf32>
    %5 = arith.addf %2, %4 : vector<8x128xf32>
    %c0_4 = arith.constant 0 : index
    %c0_5 = arith.constant 0 : index
    %6 = vector.load %arg4[%c0_4, %c0_5] : memref<8x128xf32, #tpu.memory_space<vmem>>, vector<8x128xf32>
    tpu.vector_store %arg4[%c0_4, %c0_5], %5 {strides = array<i32>} : memref<8x128xf32, #tpu.memory_space<vmem>>, vector<8x128xf32>,
    return
  }
  func.func @transform_0(%arg0: i32) -> (i32, i32) {
    %c0_i32 = arith.constant 0 : i32
    %c0_i32_0 = arith.constant 0 : i32
    return %arg0, %c0_i32 : i32, i32
  }
  func.func @transform_1(%arg0: i32) -> (i32, i32) {
    %c0_i32 = arith.constant 0 : i32
    %c0_i32_0 = arith.constant 0 : i32
    %c0_i32_1 = arith.constant 0 : i32
    return %c0_i32, %c0_i32_0 : i32, i32
  }
  func.func @transform_2(%arg0: i32) -> i32 {
    %c0_i32 = arith.constant 0 : i32
    %c0_i32_0 = arith.constant 0 : i32
    return %c0_i32 : i32
  }
  func.func @transform_3(%arg0: i32) -> (i32, i32) {
    %c0_i32 = arith.constant 0 : i32
    %c0_i32_0 = arith.constant 0 : i32
    return %c0_i32, %arg0 : i32, i32
  }
}

</mosaic_0001>

<llo_original>
// kernel: tpu_custom_call.1
$region0: #{tpu_custom_call.1}
  #allocation0 [shape = 'u32[]', space=smem, size = 0x4, offset = 0x4, fixed_abs, tag = 'smem constant byte address 0x4 - core index']
  #allocation1 [shape = 'u32[144,128]{1,0:T(1,128)}', space=vmem, size = 0x12000, scoped, tag = 'internal scratch']
  #allocation2 [shape = 'f32[1]{0:T(128)S(6)}', space=smem, size = 0x200, scoped, tag = 'scoped memory for tpu_custom_call.1']
  %s0 = inlined_call_operand.hbm [shape: f32[128,128], index: 0, kind: input, shape index: {}]
  %s1 = inlined_call_operand.hbm [shape: f32[8,128], index: 1, kind: input, shape index: {}]
  %s2 = inlined_call_operand.<no memory space> [shape: f32[1], index: 2, kind: input, shape index: {}]
  %s3 = inlined_call_operand.hbm [shape: f32[8,128], index: 3, kind: output, shape index: {}]
  %s4 = sld [smem:[#allocation0]]
  $region30: #{tpu_custom_call.1} parent=0
    _
  %s6 = ssub.s32 1, %s4
  %s7 = scalar_select 0, %s6, %s4
  %8 = sst [smem:[#allocation2]] %s2
  $region1: #{tpu_custom_call.1} parent=0
    #allocation3 [shape = 'u8[65536]{0}', space=vmem, size = 0x10000, scoped, tag = 'input window, operand 0, single buffered']
    #allocation4 [shape = 's32[1]{0}', space=sflag, size = 0x4, scoped, tag = 'scoped memory for tpu_custom_call.1']
    #allocation5 [shape = 's32[1]{0}', space=sflag, size = 0x4, scoped, tag = 'scoped memory for tpu_custom_call.1']
    #allocation6 [shape = 'u8[4096]{0}', space=vmem, size = 0x1000, scoped, tag = 'input window, operand 1, single buffered']
    #allocation7 [shape = 's32[1]{0}', space=sflag, size = 0x4, scoped, tag = 'scoped memory for tpu_custom_call.1']
    #allocation8 [shape = 'u8[4096]{0}', space=vmem, size = 0x1000, scoped, tag = 'output window, operand 0, single buffered']
    %9 = vsyncpa [#allocation4], 0
    %10 = vsyncpa [#allocation7], 0
    %11 = vsyncpa [#allocation5], 0
    // Predicated region
    $region2: #{tpu_custom_call.1} parent=1 // pred_check
      _
    $region3: #{tpu_custom_call.1} parent=1 // pred_check_branch
      %13 = sbr.rel (0) target = $region5
    $region4: #{tpu_custom_call.1} parent=1 // pred_region
      %s15 = ssub.s32 2048, 2048
      %16 = vsyncadd [#allocation4], %s15
      %s17 = sshll.u32 [#allocation3], 4
      %s18 = int_to_ptr.vmem [resolvable:$true] %s17
      %23 = dma.hbm_to_vmem [thread:$0]  %s0, 2048, %s18, [#allocation4], 128, 128, 8
    $region5: #{tpu_custom_call.1} parent=1 // pred_fallthru
      _
    // Predicated region
    $region6: #{tpu_custom_call.1} parent=1 // pred_check
      _
    $region7: #{tpu_custom_call.1} parent=1 // pred_check_branch
      %25 = sbr.rel (0) target = $region9
    $region8: #{tpu_custom_call.1} parent=1 // pred_region
      %s27 = ssub.s32 128, 128
      %28 = vsyncadd [#allocation7], %s27
      %s30 = sshll.u32 [#allocation6], 4
      %s31 = int_to_ptr.vmem [resolvable:$true] %s30
      %33 = dma.hbm_to_vmem [thread:$0]  %s1, 128, %s31, [#allocation7]
    $region9: #{tpu_custom_call.1} parent=1 // pred_fallthru
      _
    // Predicated region
    $region10: #{tpu_custom_call.1} parent=1 // pred_check
      _
    $region11: #{tpu_custom_call.1} parent=1 // pred_check_branch
      %35 = sbr.rel (0) target = $region13
    $region12: #{tpu_custom_call.1} parent=1 // pred_region
      _
    $region13: #{tpu_custom_call.1} parent=1 // pred_fallthru
      _
    // Predicated region
    $region14: #{tpu_custom_call.1} parent=1 // pred_check
      _
    $region15: #{tpu_custom_call.1} parent=1 // pred_check_branch
      %37 = sbr.rel (0) target = $region17
    $region16: #{tpu_custom_call.1} parent=1 // pred_region
      %38 = dma.done [#allocation4], 2048
    $region17: #{tpu_custom_call.1} parent=1 // pred_fallthru
      _
    // Predicated region
    $region18: #{tpu_custom_call.1} parent=1 // pred_check
      _
    $region19: #{tpu_custom_call.1} parent=1 // pred_check_branch
      %40 = sbr.rel (0) target = $region21
    $region20: #{tpu_custom_call.1} parent=1 // pred_region
      %41 = dma.done [#allocation7], 128
    $region21: #{tpu_custom_call.1} parent=1 // pred_fallthru
      _
    %v42 = vld [vmem:[#allocation6] sm:$0xff]
    %v43 = vld [vmem:[#allocation3] sm:$0xff]
    %v44 = vld [vmem:[#allocation3 + $0x8] sm:$0xff]
    %v45 = vld [vmem:[#allocation3 + $0x10] sm:$0xff]
    %v46 = vld [vmem:[#allocation3 + $0x18] sm:$0xff]
    %v47 = vld [vmem:[#allocation3 + $0x20] sm:$0xff]
    %v48 = vld [vmem:[#allocation3 + $0x28] sm:$0xff]
    %v49 = vld [vmem:[#allocation3 + $0x30] sm:$0xff]
    %v50 = vld [vmem:[#allocation3 + $0x38] sm:$0xff]
    %v51 = vld [vmem:[#allocation3 + $0x40] sm:$0xff]
    %v52 = vld [vmem:[#allocation3 + $0x48] sm:$0xff]
    %v53 = vld [vmem:[#allocation3 + $0x50] sm:$0xff]
    %v54 = vld [vmem:[#allocation3 + $0x58] sm:$0xff]
    %v55 = vld [vmem:[#allocation3 + $0x60] sm:$0xff]
    %v56 = vld [vmem:[#allocation3 + $0x68] sm:$0xff]
    %v57 = vld [vmem:[#allocation3 + $0x70] sm:$0xff]
    %v58 = vld [vmem:[#allocation3 + $0x78] sm:$0xff]
    %s59 = sld [smem:[#allocation2]]
    %v60 = vstv %s59
    %61 = vmatprep.subr.mxu0 0.0
    %62 = vmatpush1.xpose.msra.mxu0 %v58
    %63 = vmatprep.subr.mxu0 0.0
    %64 = vmatpush1.xpose.msra.mxu0 %v57
    %65 = vmatprep.subr.mxu0 0.0
    %66 = vmatpush1.xpose.msra.mxu0 %v56
    %67 = vmatprep.subr.mxu0 0.0
    %68 = vmatpush1.xpose.msra.mxu0 %v55
    %69 = vmatprep.subr.mxu0 0.0
    %70 = vmatpush1.xpose.msra.mxu0 %v54
    %71 = vmatprep.subr.mxu0 0.0
    %72 = vmatpush1.xpose.msra.mxu0 %v53
    %73 = vmatprep.subr.mxu0 0.0
    %74 = vmatpush1.xpose.msra.mxu0 %v52
    %75 = vmatprep.subr.mxu0 0.0
    %76 = vmatpush1.xpose.msra.mxu0 %v51
    %77 = vmatprep.subr.mxu0 0.0
    %78 = vmatpush1.xpose.msra.mxu0 %v50
    %79 = vmatprep.subr.mxu0 0.0
    %80 = vmatpush1.xpose.msra.mxu0 %v49
    %81 = vmatprep.subr.mxu0 0.0
    %82 = vmatpush1.xpose.msra.mxu0 %v48
    %83 = vmatprep.subr.mxu0 0.0
    %84 = vmatpush1.xpose.msra.mxu0 %v47
    %85 = vmatprep.subr.mxu0 0.0
    %86 = vmatpush1.xpose.msra.mxu0 %v46
    %87 = vmatprep.subr.mxu0 0.0
    %88 = vmatpush1.xpose.msra.mxu0 %v45
    %89 = vmatprep.subr.mxu0 0.0
    %90 = vmatpush1.xpose.msra.mxu0 %v44
    %91 = vmatprep.subr.mxu0 0.0
    %92 = vmatpush1.xpose.msra.mxu0 %v43
    %93 = vmatprep.subr.mxu0 0.0
    %94 = vmatpush2.xpose.msra.mxu0 0.0
    %95 = vmatprep.subr.mxu0 0.0
    %96 = vmatpush2.xpose.msra.mxu0 0.0
    %97 = vmatprep.subr.mxu0 0.0
    %98 = vmatpush2.xpose.msra.mxu0 0.0
    %99 = vmatprep.subr.mxu0 0.0
    %100 = vmatpush2.xpose.msra.mxu0 0.0
    %101 = vmatprep.subr.mxu0 0.0
    %102 = vmatpush2.xpose.msra.mxu0 0.0
    %103 = vmatprep.subr.mxu0 0.0
    %104 = vmatpush2.xpose.msra.mxu0 0.0
    %105 = vmatprep.subr.mxu0 0.0
    %106 = vmatpush2.xpose.msra.mxu0 0.0
    %107 = vmatprep.subr.mxu0 0.0
    %108 = vmatpush2.xpose.msra.mxu0 0.0
    %109 = vmatprep.subr.mxu0 0.0
    %110 = vmatpush2.xpose.msra.mxu0 0.0
    %111 = vmatprep.subr.mxu0 0.0
    %112 = vmatpush2.xpose.msra.mxu0 0.0
    %113 = vmatprep.subr.mxu0 0.0
    %114 = vmatpush2.xpose.msra.mxu0 0.0
    %115 = vmatprep.subr.mxu0 0.0
    %116 = vmatpush2.xpose.msra.mxu0 0.0
    %117 = vmatprep.subr.mxu0 0.0
    %118 = vmatpush2.xpose.msra.mxu0 0.0
    %119 = vmatprep.subr.mxu0 0.0
    %120 = vmatpush2.xpose.msra.mxu0 0.0
    %121 = vmatprep.subr.mxu0 0.0
    %122 = vmatpush2.xpose.msra.mxu0 0.0
    %123 = vmatprep.subr.mxu0 0.0
    %124 = vmatpush2.xpose.msra.mxu0 0.0
    %125 = vmatprep.mubr.f32.mxu0 0.0
    %126 = vmatmul.mubr.f32.gmra.mxu0 %v42
    %v127 = vpop.f32.mrf.mxu0
    %v128 = vadd.f32 %v60, %v127
    %v129 = vpop.f32.mrf.mxu0
    %130 = vdwg.mxu0
    %131 = vst [vmem:[#allocation8] sm:$0xff] %v128
    // Predicated region
    $region22: #{tpu_custom_call.1} parent=1 // pred_check
      _
    $region23: #{tpu_custom_call.1} parent=1 // pred_check_branch
      %133 = sbr.rel (0) target = $region25
    $region24: #{tpu_custom_call.1} parent=1 // pred_region
      %s135 = ssub.s32 128, 128
      %136 = vsyncadd [#allocation5], %s135
      %s138 = sshll.u32 [#allocation8], 4
      %s139 = int_to_ptr.vmem [resolvable:$true] %s138
      %141 = dma.vmem_to_hbm [thread:$0]  %s139, 128, %s3, [#allocation5]
    $region25: #{tpu_custom_call.1} parent=1 // pred_fallthru
      _
    // Predicated region
    $region26: #{tpu_custom_call.1} parent=1 // pred_check
      _
    $region27: #{tpu_custom_call.1} parent=1 // pred_check_branch
      %143 = sbr.rel (0) target = $region29
    $region28: #{tpu_custom_call.1} parent=1 // pred_region
      %144 = dma.done [#allocation5], 128
    $region29: #{tpu_custom_call.1} parent=1 // pred_fallthru
      _
    %145 = vsyncpa [#allocation4], 1
    %146 = vsyncpa [#allocation7], 1
    %147 = vsyncpa [#allocation5], 1

</llo_original>
